<compile_context>
chip_gen: v7x
topology: tpu7x:2x2x1
jax: 0.10.0
libtpu: 0.0.40
codegen_flags: <defaults>
</compile_context>

<pallas_src>
import functools

import jax
import jax.numpy as jnp
from jax import lax
from jax.experimental import pallas as pl
from jax.experimental.pallas import tpu as pltpu


_LANE = 128
_SUBLANE_ROWS_BUDGET = 128        # max bt*T sublane rows touched per chunked load
_CHUNK_VALUE_BYTES = 64 << 10     # target live f32 bytes per chunked load (~16 vregs)
_VMEM_HEADROOM = 8 << 20          # weights + compiler internal scratch + semaphores slack
_PATH_B_TARGET_TILE = 8 << 20     # ~8 MiB lane tiles in the S-tiled fallback


def _round_up(v, m):
    return (v + m - 1) // m * m


@functools.lru_cache(maxsize=None)
def _hw_params():
    """Generation-aware sizing (v5e/v6e: 128 MiB VMEM/TC; v7x: 64 MiB/TC, 2 TCs)."""
    try:
        vmem_cap = int(pltpu.get_tpu_info().vmem_capacity_bytes)
    except Exception:
        vmem_cap = 64 << 20            # conservative fallback (safe on v7x)
    # Never hand the whole physical VMEM to a single pallas_call.
    vmem_budget = min(int(vmem_cap * 0.8), 104 << 20)
    # Path A keeps a 4x double-buffered (bt, T, Sp) slab resident; derive the largest
    # per-batch slab that still fits and clamp (~24 MiB on 128 MiB chips, ~10 MiB on v7x).
    max_slab = max(2 << 20, (vmem_budget - _VMEM_HEADROOM) // 4)
    max_slab = min(max_slab, 24 << 20)
    target_slab = min(12 << 20, max_slab)
    return {"vmem_budget": vmem_budget, "max_slab": max_slab, "target_slab": target_slab}


def prepare_ta_weights(w1, w2):
    """Zero-pad the shared-MLP hidden dim up to a multiple of 8 sublanes.

    Exact math: ReLU(0) = 0 rows of w1p meet zero columns of w2p.  Hoisted out of the
    forward so the scatter is done once at parameter-setup time.
    """
    hr, t = w1.shape
    hp = max(8, _round_up(hr, 8))
    w1p = jnp.zeros((hp, t), jnp.float32).at[:hr, :].set(w1.astype(jnp.float32))
    w2p = jnp.zeros((t, hp), jnp.float32).at[:, :hr].set(w2.astype(jnp.float32))
    return w1p, w2p


def _fused_mlp_att(avg, mx, w1, w2):
    """Shared MLP applied to both pooled vectors of ONE batch in one MXU round-trip (N=2)."""
    sel = lax.broadcasted_iota(jnp.int32, (1, 2), 1)                          # [[0, 1]]
    v = jnp.where(sel == 0, avg, mx)                                          # (T, 2)
    h = jnp.maximum(jnp.dot(w1, v, preferred_element_type=jnp.float32), 0.0)  # (Hp, 2)
    y = jnp.dot(w2, h, preferred_element_type=jnp.float32)                    # (T, 2)
    return jax.nn.sigmoid(jnp.sum(y, axis=1, keepdims=True))                  # (T, 1)


def _batched_mlp_att(avg, mx, w1, w2):
    """Shared MLP for all bt batches and both pooled branches as one batched matmul pair.

    avg/mx: (bt, T, 1) f32 pooled vectors; w1: (Hp, T); w2: (T, Hp).
    Returns sigmoid(MLP(avg) + MLP(mx)) with shape (bt, T, 1).
    """
    bt = avg.shape[0]
    sel = lax.broadcasted_iota(jnp.int32, (1, 1, 2), 2)                       # lane index 0/1
    p = jnp.where(sel == 0, avg, mx)                                          # (bt, T, 2)
    w1b = jnp.broadcast_to(w1, (bt,) + w1.shape)                              # (bt, Hp, T)
    w2b = jnp.broadcast_to(w2, (bt,) + w2.shape)                              # (bt, T, Hp)
    h = jnp.maximum(jnp.einsum('bht,btn->bhn', w1b, p,
                               preferred_element_type=jnp.float32), 0.0)      # (bt, Hp, 2)
    y = jnp.einsum('bth,bhn->btn', w2b, h,
                   preferred_element_type=jnp.float32)                        # (bt, T, 2)
    return jax.nn.sigmoid(jnp.sum(y, axis=2, keepdims=True))                  # (bt, T, 1)


# ----------------------------------------------------------------------------------------------
# Path A: single pass, bt batches per grid step, chunked lane loops, mask only on tail chunk.
# ----------------------------------------------------------------------------------------------
def _ta_single_pass_kernel(x_ref, w1_ref, w2_ref, o_ref, *, s_true, chunk, n_full, last):
    bt, t, sp = x_ref.shape
    masked = sp != s_true
    tail_off = n_full * chunk
    unroll = n_full <= 8

    w1 = w1_ref[...]
    w2 = w2_ref[...]

    # ---- phase 1: pooled sum / max over S, vectorized across all bt batches ----
    def reduce_body(c, acc):
        s_a, m_a = acc
        off = pl.multiple_of(c * chunk, chunk)
        xc = x_ref[:, :, pl.ds(off, chunk)].astype(jnp.float32)      # (bt, T, chunk)
        return (s_a + jnp.sum(xc, axis=2, keepdims=True),
                jnp.maximum(m_a, jnp.max(xc, axis=2, keepdims=True)))

    init = (jnp.zeros((bt, t, 1), jnp.float32),
            jnp.full((bt, t, 1), -jnp.inf, jnp.float32))
    if n_full > 0:
        s_acc, m_acc = lax.fori_loop(0, n_full, reduce_body, init, unroll=unroll)
    else:
        s_acc, m_acc = init

    # Tail chunk (static size `last`): the only place padded lanes can appear.
    xt = x_ref[:, :, pl.ds(tail_off, last)].astype(jnp.float32)      # (bt, T, last)
    s_acc = s_acc + jnp.sum(xt, axis=2, keepdims=True)
    if masked:
        col = tail_off + lax.broadcasted_iota(jnp.int32, (1, 1, last), 2)
        xt_m = jnp.where(col < s_true, xt, -jnp.inf)
    else:
        xt_m = xt
    m_acc = jnp.maximum(m_acc, jnp.max(xt_m, axis=2, keepdims=True))

    # ---- phase 2: one batched shared-MLP for all bt batches ----
    att = _batched_mlp_att(s_acc * jnp.float32(1.0 / s_true), m_acc, w1, w2)  # (bt, T, 1)

    # ---- phase 3: re-read x from VMEM chunk by chunk, apply, stream the store ----
    # Tail first (reuses the already-loaded xt so its liveness ends before the loop).
    o_ref[:, :, pl.ds(tail_off, last)] = jnp.maximum(att * xt, 0.0).astype(o_ref.dtype)

    def apply_body(c, carry):
        off = pl.multiple_of(c * chunk, chunk)
        xc = x_ref[:, :, pl.ds(off, chunk)].astype(jnp.float32)
        o_ref[:, :, pl.ds(off, chunk)] = jnp.maximum(att * xc, 0.0).astype(o_ref.dtype)
        return carry

    if n_full > 0:
        lax.fori_loop(0, n_full, apply_body, 0, unroll=unroll)


def _single_pass(x2, w1p, w2p, s_true, hw):
    B, T, Sp = x2.shape
    hp = w1p.shape[0]
    item = x2.dtype.itemsize
    sub = max(8, 32 // item)                        # native sublane multiple for this dtype
    t_pad = _round_up(T, sub)

    per_batch_hbm = T * Sp * item
    per_batch_vmem = t_pad * Sp * item

    # Batches per grid step: big streaming slabs, but (a) leave >= 2 grid steps so both
    # v7x TensorCores get work, (b) bound vreg liveness of the chunked loads, (c) keep the
    # 4x double-buffered slabs inside the per-call VMEM budget.
    bt = max(1, min(B, hw["target_slab"] // max(per_batch_hbm, 1)))
    if B >= 2:
        bt = min(bt, B // 2)
    bt = min(bt, max(1, _SUBLANE_ROWS_BUDGET // T))
    bt = min(bt, max(1, (hw["vmem_budget"] - _VMEM_HEADROOM) // (4 * per_batch_vmem)))
    divisors = [d for d in range(1, bt + 1) if B % d == 0]
    even = [d for d in divisors if (B // d) % 2 == 0]
    bt = max(even) if even else max(divisors)

    # Lane-chunk for the in-kernel reduce/apply loops: cap the live f32 value size.
    chunk = (_CHUNK_VALUE_BYTES // (bt * T * 4)) // _LANE * _LANE
    chunk = int(max(_LANE, min(chunk, 2048, Sp)))
    n_full = (Sp - 1) // chunk                      # full chunks before the static tail
    last = Sp - n_full * chunk                      # tail chunk size (multiple of 128)

    slab_vmem = bt * per_batch_vmem
    weights = 2 * (w1p.size + w2p.size) * 4
    footprint = 4 * slab_vmem + weights + _VMEM_HEADROOM
    vmem_limit = int(min(max(footprint, 32 << 20), hw["vmem_budget"]))

    kernel = functools.partial(_ta_single_pass_kernel, s_true=s_true,
                               chunk=chunk, n_full=n_full, last=last)

    return pl.pallas_call(
        kernel,
        out_shape=jax.ShapeDtypeStruct((B, T, Sp), x2.dtype),
        grid=(B // bt,),
        in_specs=[
            pl.BlockSpec((bt, T, Sp), lambda i: (i, 0, 0)),
            pl.BlockSpec((hp, T), lambda i: (0, 0)),
            pl.BlockSpec((T, hp), lambda i: (0, 0)),
        ],
        out_specs=pl.BlockSpec((bt, T, Sp), lambda i: (i, 0, 0)),
        compiler_params=pltpu.CompilerParams(
            dimension_semantics=("parallel",),
            vmem_limit_bytes=vmem_limit),
        cost_estimate=pl.CostEstimate(
            flops=4 * B * T * Sp + 16 * B * T * hp,
            transcendentals=B * T,
            bytes_accessed=2 * B * T * Sp * item + (w1p.size + w2p.size) * 4),
    )(x2, w1p, w2p)


# ----------------------------------------------------------------------------------------------
# Path B: two-pass, S-tiled fallback for very large C*H*W (bounded VMEM regardless of shape).
# ----------------------------------------------------------------------------------------------
def _ta_reduce_kernel(x_ref, w1_ref, w2_ref, att_ref, s_acc, m_acc, *, s_true, tile_s, masked):
    s = pl.program_id(1)
    last = pl.num_programs(1) - 1

    @pl.when(s == 0)
    def _():
        s_acc[...] = jnp.zeros_like(s_acc)
        m_acc[...] = jnp.full_like(m_acc, -jnp.inf)

    xc = x_ref[...].astype(jnp.float32)                              # (T, tile_s)
    s_acc[...] += jnp.sum(xc, axis=1, keepdims=True)

    if masked:
        # Only the final S-tile can contain padded lanes; keep the hot tiles unmasked.
        @pl.when(s != last)
        def _():
            m_acc[...] = jnp.maximum(m_acc[...], jnp.max(xc, axis=1, keepdims=True))

        @pl.when(s == last)
        def _():
            col = s * tile_s + lax.broadcasted_iota(jnp.int32, (1, tile_s), 1)
            xm = jnp.where(col < s_true, xc, -jnp.inf)
            m_acc[...] = jnp.maximum(m_acc[...], jnp.max(xm, axis=1, keepdims=True))
    else:
        m_acc[...] = jnp.maximum(m_acc[...], jnp.max(xc, axis=1, keepdims=True))

    @pl.when(s == last)
    def _():
        att_ref[...] = _fused_mlp_att(s_acc[...] * jnp.float32(1.0 / s_true),
                                      m_acc[...], w1_ref[...], w2_ref[...])


def _ta_apply_kernel(att_ref, x_ref, o_ref):
    o_ref[...] = jnp.maximum(att_ref[...] * x_ref[...].astype(jnp.float32),
                             0.0).astype(o_ref.dtype)


def _two_pass(x2, w1p, w2p, s_true, hw, tile_s=None):
    B, T, S = x2.shape
    hp = w1p.shape[0]
    item = x2.dtype.itemsize
    sub = max(8, 32 // item)
    t_pad = _round_up(T, sub)

    if tile_s is None:
        tile_s = (_PATH_B_TARGET_TILE // (T * item)) // _LANE * _LANE
        tile_cap = (hw["vmem_budget"] - _VMEM_HEADROOM) // (4 * t_pad * item)
        tile_s = max(_LANE, min(tile_s, tile_cap // _LANE * _LANE))
    n = -(-S // tile_s)                          # ceil div
    tile_s = -(-S // (n * _LANE)) * _LANE        # spread the lane padding across tiles
    sp = n * tile_s
    if sp != S:
        x2 = jnp.pad(x2, ((0, 0), (0, 0), (0, sp - S)))
    masked = sp != s_true

    vmem1 = int(min(max(2 * t_pad * tile_s * item + _VMEM_HEADROOM, 32 << 20),
                    hw["vmem_budget"]))
    att = pl.pallas_call(
        functools.partial(_ta_reduce_kernel, s_true=s_true, tile_s=tile_s, masked=masked),
        out_shape=jax.ShapeDtypeStruct((B, T, 1), jnp.float32),
        grid=(B, n),
        in_specs=[
            pl.BlockSpec((None, T, tile_s), lambda b, s: (b, 0, s)),
            pl.BlockSpec((hp, T), lambda b, s: (0, 0)),
            pl.BlockSpec((T, hp), lambda b, s: (0, 0)),
        ],
        out_specs=pl.BlockSpec((None, T, 1), lambda b, s: (b, 0, 0)),
        scratch_shapes=[pltpu.VMEM((T, 1), jnp.float32),
                        pltpu.VMEM((T, 1), jnp.float32)],
        compiler_params=pltpu.CompilerParams(
            dimension_semantics=("parallel", "arbitrary"),
            vmem_limit_bytes=vmem1),
        cost_estimate=pl.CostEstimate(
            flops=2 * B * T * sp, transcendentals=B * T,
            bytes_accessed=B * T * sp * item),
    )(x2, w1p, w2p)

    vmem2 = int(min(max(4 * t_pad * tile_s * item + _VMEM_HEADROOM, 32 << 20),
                    hw["vmem_budget"]))
    out = pl.pallas_call(
        _ta_apply_kernel,
        out_shape=jax.ShapeDtypeStruct((B, T, sp), x2.dtype),
        grid=(B, n),
        in_specs=[
            pl.BlockSpec((None, T, 1), lambda b, s: (b, 0, 0)),
            pl.BlockSpec((None, T, tile_s), lambda b, s: (b, 0, s)),
        ],
        out_specs=pl.BlockSpec((None, T, tile_s), lambda b, s: (b, 0, s)),
        compiler_params=pltpu.CompilerParams(
            dimension_semantics=("parallel", "parallel"),
            vmem_limit_bytes=vmem2),
        cost_estimate=pl.CostEstimate(
            flops=2 * B * T * sp, transcendentals=0,
            bytes_accessed=2 * B * T * sp * item),
    )(att, x2)
    return out


# ----------------------------------------------------------------------------------------------
# Public forward + reference.
# ----------------------------------------------------------------------------------------------
def ta_forward(x, w1p, w2p, *, force_two_pass=False, tile_s=None):
    """x: [B, T, C, H, W]; w1p/w2p: padded weights from prepare_ta_weights."""
    B, T, C, H, W = x.shape
    S = C * H * W
    x2 = x.reshape(B, T, S)
    item = x2.dtype.itemsize
    sub = max(8, 32 // item)
    hw = _hw_params()

    per_batch_vmem = _round_up(T, sub) * _round_up(S, _LANE) * item
    if force_two_pass or per_batch_vmem > hw["max_slab"]:
        out2 = _two_pass(x2, w1p, w2p, S, hw, tile_s=tile_s)
    else:
        sp = _round_up(S, _LANE)                 # lane-dense (multiple-of-128) stores
        if sp != S:
            x2 = jnp.pad(x2, ((0, 0), (0, 0), (0, sp - S)))
        out2 = _single_pass(x2, w1p, w2p, S, hw)

    return out2[:, :, :S].reshape(B, T, C, H, W)


def ta_reference(x, w1, w2):
    """Pure-JAX reference of the PyTorch forward."""
    avg = jnp.mean(x, axis=(2, 3, 4))                      # (B, T)
    mx = jnp.max(x, axis=(2, 3, 4))                        # (B, T)

    def mlp(v):
        return jnp.maximum(v @ w1.T, 0.0) @ w2.T

    att = jax.nn.sigmoid(mlp(avg) + mlp(mx))               # (B, T)
    return jnp.maximum(att[:, :, None, None, None] * x, 0.0)


if __name__ == "__main__":
    key = jax.random.PRNGKey(0)
    kx, k1, k2, kx2, kx3 = jax.random.split(key, 5)

    # Small shapes consistent with the module: T timesteps (Conv3d channel dim), t_ratio | T.
    B, T, C, H, W = 2, 8, 4, 16, 16
    t_ratio = 4
    Tr = T // t_ratio

    x = jax.random.normal(kx, (B, T, C, H, W), dtype=jnp.float32)
    w1 = 0.3 * jax.random.normal(k1, (Tr, T), dtype=jnp.float32)   # Conv3d(T, T//r, 1) weight
    w2 = 0.3 * jax.random.normal(k2, (T, Tr), dtype=jnp.float32)   # Conv3d(T//r, T, 1) weight
    w1p, w2p = prepare_ta_weights(w1, w2)

    ref = ta_reference(x, w1, w2)

    # Path A: single pass, batched blocks, batched shared-MLP.
    out = jax.block_until_ready(ta_forward(x, w1p, w2p))
    assert out.shape == x.shape
    assert jnp.allclose(out, ref, atol=1e-5, rtol=1e-5), "Path A mismatch vs reference"

    # Path B: S-tiled two-pass fallback (forced with a small tile so it gets exercised).
    out_b = jax.block_until_ready(ta_forward(x, w1p, w2p, force_two_pass=True, tile_s=384))
    assert jnp.allclose(out_b, ref, atol=1e-5, rtol=1e-5), "Path B mismatch vs reference"

    # Non-128-aligned spatial size exercises the lane-padding / masked-max tail path.
    xb = jax.random.normal(kx2, (2, 8, 3, 10, 10), dtype=jnp.float32)
    ref_b = ta_reference(xb, w1, w2)
    out_c = jax.block_until_ready(ta_forward(xb, w1p, w2p))
    assert jnp.allclose(out_c, ref_b, atol=1e-5, rtol=1e-5), "padded-S mismatch vs reference"

    # Larger batch exercises bt > 1, the chunked fori_loop, and the masked tail chunk together.
    xc = jax.random.normal(kx3, (8, 8, 4, 20, 20), dtype=jnp.float32)
    ref_c = ta_reference(xc, w1, w2)
    out_d = jax.block_until_ready(ta_forward(xc, w1p, w2p))
    assert jnp.allclose(out_d, ref_c, atol=1e-5, rtol=1e-5), "multi-batch mismatch vs reference"

    print("KERNEL_OK")
</pallas_src>

<mosaic_0001>
module attributes {stable_mosaic.version = 11 : i64} {
  func.func @_ta_single_pass_kernel(%arg0: i32, %arg1: memref<1x8x1024xf32, #tpu.memory_space<vmem>>, %arg2: memref<8x8xf32, #tpu.memory_space<vmem>>, %arg3: memref<8x8xf32, #tpu.memory_space<vmem>>, %arg4: memref<1x8x1024xf32, #tpu.memory_space<vmem>>) attributes {dimension_semantics = [#tpu.dimension_semantics<parallel>], iteration_bounds = array<i64: 2>, scalar_prefetch = 0 : i64, scratch_operands = 0 : i64, tpu.core_type = #tpu.core_type<tc>, window_params = [{transform_indices = @transform_0, window_bounds = array<i64: 1, 8, 1024>}, {pipeline_mode = #tpu.pipeline_mode<synchronous>, transform_indices = @transform_1, window_bounds = array<i64: 8, 8>}, {pipeline_mode = #tpu.pipeline_mode<synchronous>, transform_indices = @transform_2, window_bounds = array<i64: 8, 8>}, {transform_indices = @transform_3, window_bounds = array<i64: 1, 8, 1024>}]} {
    %c0 = arith.constant 0 : index
    %c0_0 = arith.constant 0 : index
    %0 = vector.load %arg2[%c0, %c0_0] : memref<8x8xf32, #tpu.memory_space<vmem>>, vector<8x8xf32>
    %c0_1 = arith.constant 0 : index
    %c0_2 = arith.constant 0 : index
    %1 = vector.load %arg3[%c0_1, %c0_2] : memref<8x8xf32, #tpu.memory_space<vmem>>, vector<8x8xf32>
    %cst = arith.constant 0.000000e+00 : f32
    %2 = vector.broadcast %cst : f32 to vector<1x8x1xf32>
    %cst_3 = arith.constant 0xFF800000 : f32
    %3 = vector.broadcast %cst_3 : f32 to vector<1x8x1xf32>
    %c0_4 = arith.constant 0 : index
    %c0_5 = arith.constant 0 : index
    %c0_6 = arith.constant 0 : index
    %4 = vector.load %arg1[%c0_4, %c0_5, %c0_6] : memref<1x8x1024xf32, #tpu.memory_space<vmem>>, vector<1x8x1024xf32>
    %cst_7 = arith.constant dense<0.000000e+00> : vector<1x8xf32>
    %5 = vector.multi_reduction <add>, %4, %cst_7 [2] : vector<1x8x1024xf32> to vector<1x8xf32>
    %6 = vector.shape_cast %5 : vector<1x8xf32> to vector<1x8x1xf32>
    %7 = arith.addf %2, %6 : vector<1x8x1xf32>
    %cst_8 = arith.constant dense<0xFF800000> : vector<1x8xf32>
    %8 = vector.multi_reduction <maximumf>, %4, %cst_8 [2] : vector<1x8x1024xf32> to vector<1x8xf32>
    %9 = vector.shape_cast %8 : vector<1x8xf32> to vector<1x8x1xf32>
    %10 = arith.maximumf %3, %9 : vector<1x8x1xf32>
    %cst_9 = arith.constant 9.765625E-4 : f32
    %11 = vector.broadcast %cst_9 : f32 to vector<1x8x1xf32>
    %12 = arith.mulf %7, %11 : vector<1x8x1xf32>
    %13 = tpu.iota {dimensions = array<i32: 2>} : vector<1x1x2xi32>
    %c0_i32 = arith.constant 0 : i32
    %14 = vector.broadcast %c0_i32 : i32 to vector<1x1x2xi32>
    %15 = arith.cmpi eq, %13, %14 : vector<1x1x2xi32>
    %16 = vector.shape_cast %15 : vector<1x1x2xi1> to vector<1x1x2xi1>
    %17 = vector.broadcast %16 : vector<1x1x2xi1> to vector<1x8x2xi1>
    %18 = vector.shape_cast %12 : vector<1x8x1xf32> to vector<1x8x1xf32>
    %19 = vector.broadcast %18 : vector<1x8x1xf32> to vector<1x8x2xf32>
    %20 = vector.shape_cast %10 : vector<1x8x1xf32> to vector<1x8x1xf32>
    %21 = vector.broadcast %20 : vector<1x8x1xf32> to vector<1x8x2xf32>
    %22 = arith.select %17, %19, %21 : vector<1x8x2xi1>, vector<1x8x2xf32>
    %23 = vector.shape_cast %0 : vector<8x8xf32> to vector<1x8x8xf32>
    %24 = vector.shape_cast %1 : vector<8x8xf32> to vector<1x8x8xf32>
    "tpu.trace_start"() <{level = 10 : i32, message = "bht,btn->bhn"}> : () -> ()
    %cst_10 = arith.constant dense<0.000000e+00> : vector<1x8x2xf32>
    %25 = tpu.matmul %23, %22, %cst_10 {dimension_numbers = #tpu.dot_dimension_numbers<[2], [1], [1], [2], [0, 0, 0, 1, 1, 2], [0], [0]>} : vector<1x8x8xf32>, vector<1x8x2xf32>, vector<1x8x2xf32> -> vector<1x8x2xf32>
    "tpu.trace_stop"() : () -> ()
    %cst_11 = arith.constant 0.000000e+00 : f32
    %26 = vector.broadcast %cst_11 : f32 to vector<1x8x2xf32>
    %27 = arith.maximumf %25, %26 : vector<1x8x2xf32>
    "tpu.trace_start"() <{level = 10 : i32, message = "bth,bhn->btn"}> : () -> ()
    %cst_12 = arith.constant dense<0.000000e+00> : vector<1x8x2xf32>
    %28 = tpu.matmul %24, %27, %cst_12 {dimension_numbers = #tpu.dot_dimension_numbers<[2], [1], [1], [2], [0, 0, 0, 1, 1, 2], [0], [0]>} : vector<1x8x8xf32>, vector<1x8x2xf32>, vector<1x8x2xf32> -> vector<1x8x2xf32>
    "tpu.trace_stop"() : () -> ()
    %cst_13 = arith.constant dense<0.000000e+00> : vector<1x8xf32>
    %29 = vector.multi_reduction <add>, %28, %cst_13 [2] : vector<1x8x2xf32> to vector<1x8xf32>
    %30 = vector.shape_cast %29 : vector<1x8xf32> to vector<1x8x1xf32>
    %31 = arith.negf %30 : vector<1x8x1xf32>
    %32 = math.exp %31 : vector<1x8x1xf32>
    %cst_14 = arith.constant 1.000000e+00 : f32
    %33 = vector.broadcast %cst_14 : f32 to vector<1x8x1xf32>
    %34 = arith.addf %33, %32 : vector<1x8x1xf32>
    %35 = arith.divf %33, %34 : vector<1x8x1xf32>
    %36 = vector.broadcast %35 : vector<1x8x1xf32> to vector<1x8x1024xf32>
    %37 = arith.mulf %36, %4 : vector<1x8x1024xf32>
    %cst_15 = arith.constant 0.000000e+00 : f32
    %38 = vector.broadcast %cst_15 : f32 to vector<1x8x1024xf32>
    %39 = arith.maximumf %37, %38 : vector<1x8x1024xf32>
    %c0_16 = arith.constant 0 : index
    %c0_17 = arith.constant 0 : index
    %c0_18 = arith.constant 0 : index
    %40 = vector.load %arg4[%c0_16, %c0_17, %c0_18] : memref<1x8x1024xf32, #tpu.memory_space<vmem>>, vector<1x8x1024xf32>
    tpu.vector_store %arg4[%c0_16, %c0_17, %c0_18], %39 {strides = array<i32>} : memref<1x8x1024xf32, #tpu.memory_space<vmem>>, vector<1x8x1024xf32>,
    return
  }
  func.func @transform_0(%arg0: i32) -> (i32, i32, i32) {
    %c0_i32 = arith.constant 0 : i32
    %c0_i32_0 = arith.constant 0 : i32
    %c0_i32_1 = arith.constant 0 : i32
    return %arg0, %c0_i32, %c0_i32_0 : i32, i32, i32
  }
  func.func @transform_1(%arg0: i32) -> (i32, i32) {
    %c0_i32 = arith.constant 0 : i32
    %c0_i32_0 = arith.constant 0 : i32
    %c0_i32_1 = arith.constant 0 : i32
    return %c0_i32, %c0_i32_0 : i32, i32
  }
  func.func @transform_2(%arg0: i32) -> (i32, i32) {
    %c0_i32 = arith.constant 0 : i32
    %c0_i32_0 = arith.constant 0 : i32
    %c0_i32_1 = arith.constant 0 : i32
    return %c0_i32, %c0_i32_0 : i32, i32
  }
  func.func @transform_3(%arg0: i32) -> (i32, i32, i32) {
    %c0_i32 = arith.constant 0 : i32
    %c0_i32_0 = arith.constant 0 : i32
    %c0_i32_1 = arith.constant 0 : i32
    return %arg0, %c0_i32, %c0_i32_0 : i32, i32, i32
  }
}

</mosaic_0001>

<llo_original>
// kernel: tpu_custom_call.1
$region0: #{tpu_custom_call.1}
  #allocation0 [shape = 'u32[]', space=smem, size = 0x4, offset = 0x4, fixed_abs, tag = 'smem constant byte address 0x4 - core index']
  #allocation1 [shape = 'u32[144,128]{1,0:T(1,128)}', space=vmem, size = 0x12000, scoped, tag = 'internal scratch']
  %s0 = inlined_call_operand.hbm [shape: f32[2,8,1024], index: 0, kind: input, shape index: {}]
  %s1 = inlined_call_operand.hbm [shape: f32[8,8], index: 1, kind: input, shape index: {}]
  %s2 = inlined_call_operand.hbm [shape: f32[8,8], index: 2, kind: input, shape index: {}]
  %s3 = inlined_call_operand.hbm [shape: f32[2,8,1024], index: 3, kind: output, shape index: {}]
  %s4 = sld [smem:[#allocation0]]
  $region57: #{tpu_custom_call.1} parent=0
    _
  %s6 = ssub.s32 1, %s4
  %s7 = scalar_select 0, %s6, %s4
  $region1: #{tpu_custom_call.1} parent=0
    #allocation2 [shape = 'u8[65536]{0}', space=vmem, size = 0x10000, scoped, tag = 'input window, operand 0']
    #allocation3 [shape = 's32[2]{0}', space=sflag, size = 0x8, scoped, tag = 'scoped memory for tpu_custom_call.1']
    #allocation4 [shape = 's32[2]{0}', space=sflag, size = 0x8, scoped, tag = 'scoped memory for tpu_custom_call.1']
    #allocation5 [shape = 'u8[4096]{0}', space=vmem, size = 0x1000, scoped, tag = 'input window, operand 1, single buffered']
    #allocation6 [shape = 's32[1]{0}', space=sflag, size = 0x4, scoped, tag = 'scoped memory for tpu_custom_call.1']
    #allocation7 [shape = 'u8[4096]{0}', space=vmem, size = 0x1000, scoped, tag = 'input window, operand 2, single buffered']
    #allocation8 [shape = 'u8[65536]{0}', space=vmem, size = 0x10000, scoped, tag = 'output window, operand 0']
    %8 = vsyncpa [#allocation3], 0
    %s9 = scalar_lea.sflag [#allocation3], 1
    %10 = vsyncpa %s9, 0
    %11 = vsyncpa [#allocation6], 0
    %12 = vsyncpa [#allocation4], 0
    %s13 = scalar_lea.sflag [#allocation4], 1
    %14 = vsyncpa %s13, 0
    loop: start=0, step=1, limit=4
    $region2: #{tpu_custom_call.1} parent=1 // loop_pre_header
      _
    $region3: #{tpu_custom_call.1} parent=1 // loop_header
      %s16 = sphi 0, %s20
      %p17 = scmp.ge.s32.totalorder %s16, 4
      %s26 = sphi 0, %s28
      %s29 = sphi 0, %s26
      %s30 = sphi 0, %s29
      %s46 = sphi 0, %s30
      %s50 = sphi 0, %s50
      %s52 = sphi 0, %s50
      %s53 = sphi 0, %s52
      %s67 = sphi 0, %s53
      %s71 = sphi 0, %s71
      %s73 = sphi 0, %s71
      %s74 = sphi 0, %s73
      %s88 = sphi 0, %s74
      %s94 = sphi 0, %s96
      %s97 = sphi 0, %s94
      %s98 = sphi 0, %s97
      %s114 = sphi 0, %s98
    $region4: #{tpu_custom_call.1} parent=1 // loop_header_branch
      %19 = sbr.rel (%p17) target = $region8
    $region5: #{tpu_custom_call.1} parent=1 // loop_body
      %s21 = ssub.s32 %s16, 1
      %s22 = ssub.s32 %s16, 2
      %s23 = sadd.s32 %s16, 1
      %s24 = ssub.s32 %s16, %s23
      %p25 = scmp.eq.s32.totalorder %s24, 0
      %s27 = sadd.s32 %s26, 1
      %s28 = scalar_select %p25, %s26, %s27
      %p31 = pneg %p25
      %p32 = scmp.eq.s32.totalorder %s16, 1
      %p33 = por %p31, %p32
      %p34 = scmp.ne.s32.totalorder %s26, %s29
      %p35 = scmp.eq.s32.totalorder %s16, 0
      %p36 = por %p34, %p35
      %p37 = scmp.ne.s32.totalorder %s26, %s29
      %p38 = scmp.eq.s32.totalorder %s21, 1
      %p39 = por %p37, %p38
      %p40 = scmp.ne.s32.totalorder %s29, %s30
      %p41 = scmp.eq.s32.totalorder %s21, 0
      %p42 = por %p40, %p41
      %p43 = scmp.ne.s32.totalorder %s29, %s30
      %p44 = scmp.eq.s32.totalorder %s22, 1
      %p45 = por %p43, %p44
      %p47 = scmp.ne.s32.totalorder %s30, %s46
      %p48 = scmp.eq.s32.totalorder %s22, 0
      %p49 = por %p47, %p48
      %s51 = sadd.s32 %s50, 1
      %p54 = scmp.eq.s32.totalorder %s16, 1
      %p55 = scmp.ne.s32.totalorder %s50, %s52
      %p56 = scmp.eq.s32.totalorder %s16, 0
      %p57 = por %p55, %p56
      %p58 = scmp.ne.s32.totalorder %s50, %s52
      %p59 = scmp.eq.s32.totalorder %s21, 1
      %p60 = por %p58, %p59
      %p61 = scmp.ne.s32.totalorder %s52, %s53
      %p62 = scmp.eq.s32.totalorder %s21, 0
      %p63 = por %p61, %p62
      %p64 = scmp.ne.s32.totalorder %s52, %s53
      %p65 = scmp.eq.s32.totalorder %s22, 1
      %p66 = por %p64, %p65
      %p68 = scmp.ne.s32.totalorder %s53, %s67
      %p69 = scmp.eq.s32.totalorder %s22, 0
      %p70 = por %p68, %p69
      %s72 = sadd.s32 %s71, 1
      %p75 = scmp.eq.s32.totalorder %s16, 1
      %p76 = scmp.ne.s32.totalorder %s71, %s73
      %p77 = scmp.eq.s32.totalorder %s16, 0
      %p78 = por %p76, %p77
      %p79 = scmp.ne.s32.totalorder %s71, %s73
      %p80 = scmp.eq.s32.totalorder %s21, 1
      %p81 = por %p79, %p80
      %p82 = scmp.ne.s32.totalorder %s73, %s74
      %p83 = scmp.eq.s32.totalorder %s21, 0
      %p84 = por %p82, %p83
      %p85 = scmp.ne.s32.totalorder %s73, %s74
      %p86 = scmp.eq.s32.totalorder %s22, 1
      %p87 = por %p85, %p86
      %p89 = scmp.ne.s32.totalorder %s74, %s88
      %p90 = scmp.eq.s32.totalorder %s22, 0
      %p91 = por %p89, %p90
      %s92 = ssub.s32 %s16, %s23
      %p93 = scmp.eq.s32.totalorder %s92, 0
      %s95 = sadd.s32 %s94, 1
      %s96 = scalar_select %p93, %s94, %s95
      %p99 = pneg %p93
      %p100 = scmp.eq.s32.totalorder %s16, 1
      %p101 = por %p99, %p100
      %p102 = scmp.ne.s32.totalorder %s94, %s97
      %p103 = scmp.eq.s32.totalorder %s16, 0
      %p104 = por %p102, %p103
      %p105 = scmp.ne.s32.totalorder %s94, %s97
      %p106 = scmp.eq.s32.totalorder %s21, 1
      %p107 = por %p105, %p106
      %p108 = scmp.ne.s32.totalorder %s97, %s98
      %p109 = scmp.eq.s32.totalorder %s21, 0
      %p110 = por %p108, %p109
      %p111 = scmp.ne.s32.totalorder %s97, %s98
      %p112 = scmp.eq.s32.totalorder %s22, 1
      %p113 = por %p111, %p112
      %p115 = scmp.ne.s32.totalorder %s98, %s114
      %p116 = scmp.eq.s32.totalorder %s22, 0
      %p117 = por %p115, %p116
      %p118 = scmp.le.s32.totalorder 1, %s16
      %p119 = scmp.lt.s32.totalorder %s16, 3
      %p120 = pnand %p118, %p119
      %p121 = pneg %p120
      // Predicated region
      $region9: #{tpu_custom_call.1} parent=5 // pred_check
        _
      $region10: #{tpu_custom_call.1} parent=5 // pred_check_branch
        %123 = sbr.rel (%p120) target = $region12
      $region11: #{tpu_custom_call.1} parent=5 // pred_region
        %s124 = ssub.s32 %s16, 1
        // Predicated region
        $region13: #{tpu_custom_call.1} parent=11 // pred_check
          %p125 = pneg %p63
        $region14: #{tpu_custom_call.1} parent=11 // pred_check_branch
          %127 = sbr.rel (%p125) target = $region16
        $region15: #{tpu_custom_call.1} parent=11 // pred_region
          %s129 = ssub.s32 128, 128
          %130 = vsyncadd [#allocation6], %s129
          %s132 = sshll.u32 [#allocation5], 4
          %s133 = int_to_ptr.vmem [resolvable:$true] %s132
          %135 = dma.hbm_to_vmem [thread:$0]  %s1, 128, %s133, [#allocation6]
        $region16: #{tpu_custom_call.1} parent=11 // pred_fallthru
          _
        // Predicated region
        $region17: #{tpu_custom_call.1} parent=11 // pred_check
          %p136 = pneg %p84
        $region18: #{tpu_custom_call.1} parent=11 // pred_check_branch
          %138 = sbr.rel (%p136) target = $region20
        $region19: #{tpu_custom_call.1} parent=11 // pred_region
          %s140 = ssub.s32 128, 128
          %141 = vsyncadd [#allocation6], %s140
          %s143 = sshll.u32 [#allocation7], 4
          %s144 = int_to_ptr.vmem [resolvable:$true] %s143
          %146 = dma.hbm_to_vmem [thread:$0]  %s2, 128, %s144, [#allocation6]
        $region20: #{tpu_custom_call.1} parent=11 // pred_fallthru
          _
      $region12: #{tpu_custom_call.1} parent=5 // pred_fallthru
        _
      %p147 = scmp.lt.s32.totalorder %s16, 2
      // Predicated region
      $region21: #{tpu_custom_call.1} parent=5 // pred_check
        %p148 = pneg %p147
      $region22: #{tpu_custom_call.1} parent=5 // pred_check_branch
        %150 = sbr.rel (%p148) target = $region24
      $region23: #{tpu_custom_call.1} parent=5 // pred_region
        // Predicated region
        $region25: #{tpu_custom_call.1} parent=23 // pred_check
          %p151 = pneg %p36
        $region26: #{tpu_custom_call.1} parent=23 // pred_check_branch
          %153 = sbr.rel (%p151) target = $region28
        $region27: #{tpu_custom_call.1} parent=23 // pred_region
          %s154 = sand.u32 %s26, 1
          %s155 = scalar_lea.sflag [#allocation3], %s154
          %s156 = sand.u32 %s26, 1
          %s157 = smul.addr %s156, 64
          %s158 = scalar_lea.vmem [#allocation2], %s157
          %s160 = ssub.s32 1024, 1024
          %161 = vsyncadd %s155, %s160
          %s162 = smul.addr %s16, 8
          %s163 = smul.addr %s162, 128
          %s164 = scalar_lea.hbm %s0, %s163
          %s166 = sshll.u32 %s158, 4
          %s167 = int_to_ptr.vmem [resolvable:$true] %s166
          %169 = dma.hbm_to_vmem [thread:$0]  %s164, 1024, %s167, %s155
        $region28: #{tpu_custom_call.1} parent=23 // pred_fallthru
          _
      $region24: #{tpu_custom_call.1} parent=5 // pred_fallthru
        _
      %p170 = scmp.le.s32.totalorder 1, %s16
      %p171 = scmp.lt.s32.totalorder %s16, 3
      %p172 = pnand %p170, %p171
      %p173 = pneg %p172
      // Predicated region
      $region29: #{tpu_custom_call.1} parent=5 // pred_check
        _
      $region30: #{tpu_custom_call.1} parent=5 // pred_check_branch
        %175 = sbr.rel (%p172) target = $region32
      $region31: #{tpu_custom_call.1} parent=5 // pred_region
        %s176 = ssub.s32 %s16, 1
        %s177 = sand.u32 %s29, 1
        %s178 = scalar_lea.sflag [#allocation3], %s177
        %s179 = sand.u32 %s29, 1
        %s180 = smul.addr %s179, 64
        %s181 = scalar_lea.vmem [#allocation2], %s180
        // Predicated region
        $region33: #{tpu_custom_call.1} parent=31 // pred_check
          %p182 = pneg %p42
        $region34: #{tpu_custom_call.1} parent=31 // pred_check_branch
          %184 = sbr.rel (%p182) target = $region36
        $region35: #{tpu_custom_call.1} parent=31 // pred_region
          %185 = dma.done %s178, 1024
        $region36: #{tpu_custom_call.1} parent=31 // pred_fallthru
          _
        // Predicated region
        $region37: #{tpu_custom_call.1} parent=31 // pred_check
          %p186 = pneg %p63
        $region38: #{tpu_custom_call.1} parent=31 // pred_check_branch
          %188 = sbr.rel (%p186) target = $region40
        $region39: #{tpu_custom_call.1} parent=31 // pred_region
          %189 = dma.done [#allocation6], 128
        $region40: #{tpu_custom_call.1} parent=31 // pred_fallthru
          _
        // Predicated region
        $region41: #{tpu_custom_call.1} parent=31 // pred_check
          %p190 = pneg %p84
        $region42: #{tpu_custom_call.1} parent=31 // pred_check_branch
          %192 = sbr.rel (%p190) target = $region44
        $region43: #{tpu_custom_call.1} parent=31 // pred_region
          %193 = dma.done [#allocation6], 128
        $region44: #{tpu_custom_call.1} parent=31 // pred_fallthru
          _
        %s194 = sand.u32 %s29, 1
        %s195 = scalar_lea.sflag [#allocation3], %s194
        %s196 = sand.u32 %s29, 1
        %s197 = smul.addr %s196, 64
        %s198 = scalar_lea.vmem [#allocation2], %s197
        %p199 = pneg %p42
        %p200 = pneg %p39
        %p201 = pneg %p63
        %p202 = pneg %p60
        %p203 = pneg %p84
        %p204 = pneg %p81
        %p205 = pneg %p110
        %p206 = pneg %p107
        %s207 = sand.u32 %s97, 1
        %s208 = scalar_lea.sflag [#allocation4], %s207
        %s209 = sand.u32 %s97, 1
        %s210 = smul.addr %s209, 64
        %s211 = scalar_lea.vmem [#allocation8], %s210
        %v212 = vld [vmem:[#allocation5] sm:$0xff]
        %v213 = vld [vmem:[#allocation7] sm:$0xff]
        %v214 = vld [vmem:[%s181] sm:$0xff]
        %v215 = vld [vmem:[%s181 + $0x8] sm:$0xff]
        %v216 = vld [vmem:[%s181 + $0x10] sm:$0xff]
        %v217 = vld [vmem:[%s181 + $0x18] sm:$0xff]
        %v218 = vld [vmem:[%s181 + $0x20] sm:$0xff]
        %v219 = vld [vmem:[%s181 + $0x28] sm:$0xff]
        %v220 = vld [vmem:[%s181 + $0x30] sm:$0xff]
        %v221 = vld [vmem:[%s181 + $0x38] sm:$0xff]
        %v222 = vadd.f32 %v214, %v215
        %v223 = vadd.f32 %v222, %v216
        %v224 = vadd.f32 %v223, %v217
        %v225 = vadd.f32 %v224, %v218
        %v226 = vadd.f32 %v225, %v219
        %v227 = vadd.f32 %v226, %v220
        %v228 = vadd.f32 %v227, %v221
        %229 = vadd.xlane.f32.xlu0 %v228
        %v230 = vpop.xlane.xlu0 %229
        %v231 = vadd.f32 %v230, 0.0
        %v232 = vmax.f32 %v214, %v218
        %v233 = vmax.f32 %v215, %v219
        %v234 = vmax.f32 %v216, %v220
        %v235 = vmax.f32 %v217, %v221
        %v236 = vmax.f32 %v232, %v233
        %v237 = vmax.f32 %v234, %v235
        %v238 = vmax.f32 %v236, %v237
        %239 = vmax.xlane.f32.xlu0 %v238
        %v240 = vpop.xlane.xlu0 %239
        %v241 = vmul.f32 %v231, 0.0009765625
        %v242 = vlaneseq
        %v243 = vand.u32 %v242, 127
        %vm244 = vcmp.eq.s32.totalorder %v243, 0
        %v245 = vsel %vm244, 1, 0
        %vm246 = vcmp.eq.s32.totalorder %v245, 1
        %v247 = vsel %vm246, %v241, %v240
        %vm248 = vcmask 64512
        %v250 = vsel %vm248, %v212, 0
        %252 = vmatprep.subr.mxu0 0.0
        %253 = vmatpush1.msra.mxu0 %v247
        %254 = vmatprep.subr.mxu0 0.0
        %255 = vmatpush1.msra.mxu0 0.0
        %256 = vmatprep.subr.mxu0 0.0
        %257 = vmatpush1.msra.mxu0 0.0
        %258 = vmatprep.subr.mxu0 0.0
        %259 = vmatpush1.msra.mxu0 0.0
        %260 = vmatprep.subr.mxu0 0.0
        %261 = vmatpush1.msra.mxu0 0.0
        %262 = vmatprep.subr.mxu0 0.0
        %263 = vmatpush1.msra.mxu0 0.0
        %264 = vmatprep.subr.mxu0 0.0
        %265 = vmatpush1.msra.mxu0 0.0
        %266 = vmatprep.subr.mxu0 0.0
        %267 = vmatpush1.msra.mxu0 0.0
        %268 = vmatprep.subr.mxu0 0.0
        %269 = vmatpush1.msra.mxu0 0.0
        %270 = vmatprep.subr.mxu0 0.0
        %271 = vmatpush1.msra.mxu0 0.0
        %272 = vmatprep.subr.mxu0 0.0
        %273 = vmatpush1.msra.mxu0 0.0
        %274 = vmatprep.subr.mxu0 0.0
        %275 = vmatpush1.msra.mxu0 0.0
        %276 = vmatprep.subr.mxu0 0.0
        %277 = vmatpush1.msra.mxu0 0.0
        %278 = vmatprep.subr.mxu0 0.0
        %279 = vmatpush1.msra.mxu0 0.0
        %280 = vmatprep.subr.mxu0 0.0
        %281 = vmatpush1.msra.mxu0 0.0
        %282 = vmatprep.subr.mxu0 0.0
        %283 = vmatpush1.msra.mxu0 0.0
        %284 = vmatprep.subr.mxu0 0.0
        %285 = vmatpush1.msra.mxu0 0.0
        %286 = vmatprep.subr.mxu0 0.0
        %287 = vmatpush1.msra.mxu0 0.0
        %288 = vmatprep.subr.mxu0 0.0
        %289 = vmatpush1.msra.mxu0 0.0
        %290 = vmatprep.subr.mxu0 0.0
        %291 = vmatpush1.msra.mxu0 0.0
        %292 = vmatprep.subr.mxu0 0.0
        %293 = vmatpush1.msra.mxu0 0.0
        %294 = vmatprep.subr.mxu0 0.0
        %295 = vmatpush1.msra.mxu0 0.0
        %296 = vmatprep.subr.mxu0 0.0
        %297 = vmatpush1.msra.mxu0 0.0
        %298 = vmatprep.subr.mxu0 0.0
        %299 = vmatpush1.msra.mxu0 0.0
        %300 = vmatprep.subr.mxu0 0.0
        %301 = vmatpush1.msra.mxu0 0.0
        %302 = vmatprep.subr.mxu0 0.0
        %303 = vmatpush1.msra.mxu0 0.0
        %304 = vmatprep.subr.mxu0 0.0
        %305 = vmatpush1.msra.mxu0 0.0
        %306 = vmatprep.subr.mxu0 0.0
        %307 = vmatpush1.msra.mxu0 0.0
        %308 = vmatprep.subr.mxu0 0.0
        %309 = vmatpush1.msra.mxu0 0.0
        %310 = vmatprep.subr.mxu0 0.0
        %311 = vmatpush1.msra.mxu0 0.0
        %312 = vmatprep.subr.mxu0 0.0
        %313 = vmatpush1.msra.mxu0 0.0
        %314 = vmatprep.subr.mxu0 0.0
        %315 = vmatpush1.msra.mxu0 0.0
        %316 = vmatprep.mubr.f32.mxu0 0.0
        %317 = vmatmul.mubr.f32.gmra.mrb[0].mxu0 %v250
        %v318 = vpop.f32.mrb[0].mxu0
        %v319 = vadd.f32 0.0, %v318
        %v320 = vpop.f32.mrb[0].mxu0
        %321 = vdwg.mxu0
        %v322 = vmax.f32 %v319, 0.0
        %v324 = vsel %vm248, %v213, 0
        %326 = vmatprep.subr.mxu0 0.0
        %327 = vmatpush1.msra.mxu0 %v322
        %328 = vmatprep.subr.mxu0 0.0
        %329 = vmatpush1.msra.mxu0 0.0
        %330 = vmatprep.subr.mxu0 0.0
        %331 = vmatpush1.msra.mxu0 0.0
        %332 = vmatprep.subr.mxu0 0.0
        %333 = vmatpush1.msra.mxu0 0.0
        %334 = vmatprep.subr.mxu0 0.0
        %335 = vmatpush1.msra.mxu0 0.0
        %336 = vmatprep.subr.mxu0 0.0
        %337 = vmatpush1.msra.mxu0 0.0
        %338 = vmatprep.subr.mxu0 0.0
        %339 = vmatpush1.msra.mxu0 0.0
        %340 = vmatprep.subr.mxu0 0.0
        %341 = vmatpush1.msra.mxu0 0.0
        %342 = vmatprep.subr.mxu0 0.0
        %343 = vmatpush1.msra.mxu0 0.0
        %344 = vmatprep.subr.mxu0 0.0
        %345 = vmatpush1.msra.mxu0 0.0
        %346 = vmatprep.subr.mxu0 0.0
        %347 = vmatpush1.msra.mxu0 0.0
        %348 = vmatprep.subr.mxu0 0.0
        %349 = vmatpush1.msra.mxu0 0.0
        %350 = vmatprep.subr.mxu0 0.0
        %351 = vmatpush1.msra.mxu0 0.0
        %352 = vmatprep.subr.mxu0 0.0
        %353 = vmatpush1.msra.mxu0 0.0
        %354 = vmatprep.subr.mxu0 0.0
        %355 = vmatpush1.msra.mxu0 0.0
        %356 = vmatprep.subr.mxu0 0.0
        %357 = vmatpush1.msra.mxu0 0.0
        %358 = vmatprep.subr.mxu0 0.0
        %359 = vmatpush1.msra.mxu0 0.0
        %360 = vmatprep.subr.mxu0 0.0
        %361 = vmatpush1.msra.mxu0 0.0
        %362 = vmatprep.subr.mxu0 0.0
        %363 = vmatpush1.msra.mxu0 0.0
        %364 = vmatprep.subr.mxu0 0.0
        %365 = vmatpush1.msra.mxu0 0.0
        %366 = vmatprep.subr.mxu0 0.0
        %367 = vmatpush1.msra.mxu0 0.0
        %368 = vmatprep.subr.mxu0 0.0
        %369 = vmatpush1.msra.mxu0 0.0
        %370 = vmatprep.subr.mxu0 0.0
        %371 = vmatpush1.msra.mxu0 0.0
        %372 = vmatprep.subr.mxu0 0.0
        %373 = vmatpush1.msra.mxu0 0.0
        %374 = vmatprep.subr.mxu0 0.0
        %375 = vmatpush1.msra.mxu0 0.0
        %376 = vmatprep.subr.mxu0 0.0
        %377 = vmatpush1.msra.mxu0 0.0
        %378 = vmatprep.subr.mxu0 0.0
        %379 = vmatpush1.msra.mxu0 0.0
        %380 = vmatprep.subr.mxu0 0.0
        %381 = vmatpush1.msra.mxu0 0.0
        %382 = vmatprep.subr.mxu0 0.0
        %383 = vmatpush1.msra.mxu0 0.0
        %384 = vmatprep.subr.mxu0 0.0
        %385 = vmatpush1.msra.mxu0 0.0
        %386 = vmatprep.subr.mxu0 0.0
        %387 = vmatpush1.msra.mxu0 0.0
        %388 = vmatprep.subr.mxu0 0.0
        %389 = vmatpush1.msra.mxu0 0.0
        %390 = vmatprep.mubr.f32.mxu0 0.0
        %391 = vmatmul.mubr.f32.gmra.mrb[0].mxu0 %v324
        %v392 = vpop.f32.mrb[0].mxu0
        %v393 = vadd.f32 0.0, %v392
        %v394 = vpop.f32.mrb[0].mxu0
        %395 = vdwg.mxu0
        %vm396 = vcmask 15360
        %v397 = vsel %vm396, %v393, 0.0
        %398 = vadd.xlane.f32.xlu0 %v397
        %v399 = vpop.xlane.xlu0 %398
        %v400 = vxor.u32 %v399, 2147483648
        %v401 = vmul.f32 %v400, 1.442695
        %v402 = vpow.pop %v401
        %v403 = vadd.f32 %v402, 1.0
        %v404 = vrcp.pop %v403
        %v405 = vmul.f32 1.0, %v404
        %v406 = vmul.f32 %v405, %v214
        %v407 = vmul.f32 %v405, %v215
        %v408 = vmul.f32 %v405, %v216
        %v409 = vmul.f32 %v405, %v217
        %v410 = vmul.f32 %v405, %v218
        %v411 = vmul.f32 %v405, %v219
        %v412 = vmul.f32 %v405, %v220
        %v413 = vmul.f32 %v405, %v221
        %v414 = vmax.f32 %v406, 0.0
        %v415 = vmax.f32 %v407, 0.0
        %v416 = vmax.f32 %v408, 0.0
        %v417 = vmax.f32 %v409, 0.0
        %v418 = vmax.f32 %v410, 0.0
        %v419 = vmax.f32 %v411, 0.0
        %v420 = vmax.f32 %v412, 0.0
        %v421 = vmax.f32 %v413, 0.0
        %422 = vst [vmem:[%s211] sm:$0xff] %v414
        %423 = vst [vmem:[%s211 + $0x8] sm:$0xff] %v415
        %424 = vst [vmem:[%s211 + $0x10] sm:$0xff] %v416
        %425 = vst [vmem:[%s211 + $0x18] sm:$0xff] %v417
        %426 = vst [vmem:[%s211 + $0x20] sm:$0xff] %v418
        %427 = vst [vmem:[%s211 + $0x28] sm:$0xff] %v419
        %428 = vst [vmem:[%s211 + $0x30] sm:$0xff] %v420
        %429 = vst [vmem:[%s211 + $0x38] sm:$0xff] %v421
        %s430 = sand.u32 %s97, 1
        %s431 = scalar_lea.sflag [#allocation4], %s430
        %s432 = sand.u32 %s97, 1
        %s433 = smul.addr %s432, 64
        %s434 = scalar_lea.vmem [#allocation8], %s433
        // Predicated region
        $region45: #{tpu_custom_call.1} parent=31 // pred_check
          %p435 = pneg %p107
        $region46: #{tpu_custom_call.1} parent=31 // pred_check_branch
          %437 = sbr.rel (%p435) target = $region48
        $region47: #{tpu_custom_call.1} parent=31 // pred_region
          %s439 = ssub.s32 1024, 1024
          %440 = vsyncadd %s431, %s439
          %s441 = smul.addr %s21, 8
          %s442 = smul.addr %s441, 128
          %s443 = scalar_lea.hbm %s3, %s442
          %s445 = sshll.u32 %s434, 4
          %s446 = int_to_ptr.vmem [resolvable:$true] %s445
          %448 = dma.vmem_to_hbm [thread:$0]  %s446, 1024, %s443, %s431
        $region48: #{tpu_custom_call.1} parent=31 // pred_fallthru
          _
      $region32: #{tpu_custom_call.1} parent=5 // pred_fallthru
        _
      %p449 = scmp.le.s32.totalorder 2, %s16
      // Predicated region
      $region49: #{tpu_custom_call.1} parent=5 // pred_check
        %p450 = pneg %p449
      $region50: #{tpu_custom_call.1} parent=5 // pred_check_branch
        %452 = sbr.rel (%p450) target = $region52
      $region51: #{tpu_custom_call.1} parent=5 // pred_region
        %s453 = ssub.s32 %s16, 2
        // Predicated region
        $region53: #{tpu_custom_call.1} parent=51 // pred_check
          %p454 = pneg %p113
        $region54: #{tpu_custom_call.1} parent=51 // pred_check_branch
          %456 = sbr.rel (%p454) target = $region56
        $region55: #{tpu_custom_call.1} parent=51 // pred_region
          %s457 = sand.u32 %s98, 1
          %s458 = scalar_lea.sflag [#allocation4], %s457
          %s459 = sand.u32 %s98, 1
          %s460 = smul.addr %s459, 64
          %s461 = scalar_lea.vmem [#allocation8], %s460
          %462 = dma.done %s458, 1024
        $region56: #{tpu_custom_call.1} parent=51 // pred_fallthru
          _
      $region52: #{tpu_custom_call.1} parent=5 // pred_fallthru
        _
    $region6: #{tpu_custom_call.1} parent=1 // loop_footer
      %s20 = sadd.s32 1, %s16
    $region7: #{tpu_custom_call.1} parent=1 // loop_footer_branch
      %15 = sbr.rel target = $region3
    $region8: #{tpu_custom_call.1} parent=1 // loop_exit
      _
    %463 = vsyncpa [#allocation3], 1
    %s464 = scalar_lea.sflag [#allocation3], 1
    %465 = vsyncpa %s464, 1
    %466 = vsyncpa [#allocation6], 1
    %467 = vsyncpa [#allocation4], 1
    %s468 = scalar_lea.sflag [#allocation4], 1
    %469 = vsyncpa %s468, 1

</llo_original>
